<compile_context>
chip_gen: v7x
topology: tpu7x:2x2x1
jax: 0.10.0
libtpu: 0.0.40
codegen_flags: <defaults>
</compile_context>

<pallas_src>
import math
import functools

import jax
import jax.numpy as jnp
from jax import lax
from jax.experimental import pallas as pl
from jax.experimental.pallas import tpu as pltpu


def _round_up(x: int, m: int) -> int:
    return -(-x // m) * m


def _tpu_vmem_capacity_bytes(default: int = 64 * 1024 * 1024) -> int:
    """Physical VMEM per core; 64 MiB is the smallest across v5e/v6e/v7x."""
    try:
        cap = getattr(pltpu.get_tpu_info(), "vmem_capacity_bytes", None)
        if cap:
            return int(cap)
    except Exception:
        pass
    return default


def _tpu_num_cores(default: int = 1) -> int:
    """Best-effort TensorCore count (v7x has 2 per chip)."""
    try:
        info = pltpu.get_tpu_info()
        for name in ("num_cores", "core_count", "num_tensorcores", "tensorcore_count"):
            v = getattr(info, name, None)
            if isinstance(v, int) and v > 0:
                return v
    except Exception:
        pass
    return default


def _choose_tiles(T, Bp0, Hp, whh_itemsize, *, batch_tile=None, time_chunk=None):
    """Pick (batch_tile, time_chunk, vmem_limit_bytes): fill the MXU rows, fit VMEM."""
    vmem_cap = _tpu_vmem_capacity_bytes()
    budget = int(vmem_cap * 0.7)          # headroom for Pallas internals / semaphores
    cores = _tpu_num_cores()

    if batch_tile is None:
        batch_tile = min(Bp0, 256)        # ~MXU row count on v6e/v7x; big tiles amortize
        if cores >= 2 and Bp0 >= 16:      # MXU push/drain latency on the serial t-chain
            # keep >= 1 batch tile per TensorCore so the "parallel" axis can shard
            batch_tile = min(batch_tile, _round_up(-(-Bp0 // cores), 8))
    batch_tile = max(8, min(_round_up(int(batch_tile), 8), Bp0))

    if time_chunk is None:
        time_chunk = min(T, 32)
    time_chunk = max(1, int(time_chunk))

    def vmem_need(tc, bt):
        drive = tc * bt * Hp * 4
        out = tc * bt * Hp * 4
        init = bt * Hp * 4
        whh = Hp * Hp * whh_itemsize
        state = bt * Hp * 4
        # drive/out/init/W_hh are double-buffered by the Pallas pipeline; state scratch isn't.
        # (W_hh could be single-buffered via pipeline_mode=pl.Buffered(1); kept default here.)
        return 2 * (drive + out + init + whh) + state

    while vmem_need(time_chunk, batch_tile) > budget and time_chunk > 4:
        time_chunk = max(4, time_chunk // 2)
    while vmem_need(time_chunk, batch_tile) > budget and batch_tile > 8:
        batch_tile = max(8, _round_up(batch_tile // 2, 8))

    need = vmem_need(time_chunk, batch_tile)
    vmem_limit = min(max(need + need // 4 + (4 << 20), 32 << 20), int(vmem_cap * 0.9))
    vmem_limit = max(vmem_limit, need)
    return batch_tile, time_chunk, int(vmem_limit)


def _make_recurrence_kernel(T_chunk, alpha, activation, matmul_dtype, unroll):
    one_minus_alpha = float(1.0 - float(alpha))

    if activation == "relu":
        act_fn = lambda s: jnp.maximum(s, 0.0)
    elif activation == "softplus":
        act_fn = jax.nn.softplus
    else:
        raise ValueError(f"unsupported activation: {activation!r}")

    unroll_n = max(1, min(int(unroll), int(T_chunk)))

    def kernel(drive_ref, w_hh_ref, init_ref, out_ref, state_ref):
        tc = pl.program_id(1)

        # First time chunk of every batch tile: (re)load the carried state.
        @pl.when(tc == 0)
        def _():
            state_ref[...] = init_ref[...]

        def body(t, state):
            act = act_fn(state).astype(matmul_dtype)
            # W_hh block index never changes -> resident in VMEM; consume it as a VMEM
            # operand feeding the MXU rather than pinning the full matrix in vregs.
            state = (one_minus_alpha * state
                     + jnp.dot(act, w_hh_ref[...], preferred_element_type=jnp.float32)
                     + drive_ref[t])
            out_ref[t] = state          # row t of this chunk == state index tc*T_chunk+t+1
            return state

        state_final = lax.fori_loop(0, T_chunk, body, state_ref[...], unroll=unroll_n)
        state_ref[...] = state_final    # carry across time chunks

    return kernel


def rnn_forward(inputs, initial_state, noise, weight_ih, weight_hh, bias_h,
                *, alpha, sigma_rec, activation="relu",
                batch_tile=None, time_chunk=None,
                matmul_dtype=jnp.float32, unroll=8):
    """Full recurrent loop in one pallas_call.

    inputs:        [T, B, n_input] float32
    initial_state: [B, H]          float32
    noise:         [T, B, H]       float32 (standard normal; scaled by sigma_rec)
    returns:       [T+1, B, H]     float32 (state_collector, stacked)
    """
    T, B, _ = inputs.shape
    H = initial_state.shape[-1]
    alpha = float(alpha)

    # 1) Non-recurrent "drive", alpha pre-folded: one fully parallel matmul in the wrapper.
    drive = (alpha * (jnp.einsum("tbi,ih->tbh", inputs, weight_ih,
                                 preferred_element_type=jnp.float32)
                      + bias_h + sigma_rec * noise)).astype(jnp.float32)

    # 2) Lane/sublane-dense padding.
    Hp = _round_up(max(H, 128), 128)
    Bp0 = _round_up(max(B, 8), 8)

    whh_itemsize = jnp.dtype(matmul_dtype).itemsize
    batch_tile, time_chunk, vmem_limit = _choose_tiles(
        T, Bp0, Hp, whh_itemsize, batch_tile=batch_tile, time_chunk=time_chunk)

    Bp = _round_up(Bp0, batch_tile)
    Tp = _round_up(T, time_chunk)
    nb = Bp // batch_tile
    ntc = Tp // time_chunk

    drive_p = jnp.pad(drive, ((0, Tp - T), (0, Bp - B), (0, Hp - H)))
    init_p = jnp.pad(initial_state.astype(jnp.float32), ((0, Bp - B), (0, Hp - H)))
    # alpha folded into the recurrent weight; pre-cast to the MXU operand dtype so the
    # kernel DMAs half the bytes for bf16 and does no in-kernel conversion.
    w_hh_p = jnp.pad((alpha * weight_hh).astype(jnp.float32),
                     ((0, Hp - H), (0, Hp - H))).astype(matmul_dtype)

    kernel = _make_recurrence_kernel(time_chunk, alpha, activation, matmul_dtype, unroll)

    out_p = pl.pallas_call(
        kernel,
        out_shape=jax.ShapeDtypeStruct((Tp, Bp, Hp), jnp.float32),
        grid_spec=pltpu.PrefetchScalarGridSpec(
            num_scalar_prefetch=0,
            # Batch tiles independent -> "parallel" (megacore / 2 TCs on v7x);
            # time chunks carry state -> "arbitrary".
            grid=(nb, ntc),
            in_specs=[
                pl.BlockSpec((time_chunk, batch_tile, Hp), lambda b, tc: (tc, b, 0)),  # drive
                pl.BlockSpec((Hp, Hp), lambda b, tc: (0, 0)),                          # W_hh
                pl.BlockSpec((batch_tile, Hp), lambda b, tc: (b, 0)),                  # init
            ],
            out_specs=pl.BlockSpec((time_chunk, batch_tile, Hp), lambda b, tc: (tc, b, 0)),
            scratch_shapes=[pltpu.VMEM((batch_tile, Hp), jnp.float32)],                # state
        ),
        compiler_params=pltpu.CompilerParams(
            dimension_semantics=("parallel", "arbitrary"),
            vmem_limit_bytes=vmem_limit,
        ),
    )(drive_p, w_hh_p, init_p)

    # Kernel emits states 1..T (padding sliced away); prepend the exact initial state.
    states = out_p[:T, :B, :H]
    return jnp.concatenate([initial_state[None, :, :].astype(jnp.float32), states], axis=0)


def rnn_forward_ref(inputs, initial_state, noise, weight_ih, weight_hh, bias_h,
                    *, alpha, sigma_rec, activation="relu"):
    """Pure-JAX reference mirroring the PyTorch forward."""
    act_fn = (lambda x: jnp.maximum(x, 0.0)) if activation == "relu" else jax.nn.softplus
    state = initial_state
    collector = [state]
    for t in range(inputs.shape[0]):
        state_new = (act_fn(state) @ weight_hh + bias_h
                     + inputs[t] @ weight_ih
                     + noise[t] * sigma_rec)
        state = (1.0 - alpha) * state + alpha * state_new
        collector.append(state)
    return jnp.stack(collector, axis=0)


def init_params(key, n_input, n_rnn, n_output, initial_std):
    """Deterministic parameter init matching the shapes/statistics in __init__
    (rule_name='decision_making', n_input=5)."""
    k_ih, k_ih2, k_ih3, k_hh, k_out = jax.random.split(key, 5)
    w_ih = jax.random.uniform(k_ih, (n_input, n_rnn), jnp.float32,
                              -1.0 / math.sqrt(2.0), 1.0 / math.sqrt(2.0))
    row2 = jax.random.uniform(k_ih2, (1, n_rnn), jnp.float32, -1.0, 1.0)
    rows34 = jax.random.uniform(k_ih3, (2, n_rnn), jnp.float32, -1.0, 1.0)
    w_ih = w_ih.at[2:3].set(row2).at[3:5].set(rows34)

    hh_mask = jnp.ones((n_rnn, n_rnn), jnp.float32) - jnp.eye(n_rnn, dtype=jnp.float32)
    non_diag = jax.random.normal(k_hh, (n_rnn, n_rnn), jnp.float32) * (
        initial_std / math.sqrt(n_rnn))
    w_hh = jnp.eye(n_rnn, dtype=jnp.float32) * 0.999 + hh_mask * non_diag

    bias_h = jnp.zeros((1, n_rnn), jnp.float32)
    w_out = jax.random.normal(k_out, (n_rnn, n_output), jnp.float32) * (
        0.4 / math.sqrt(n_rnn))             # not used in forward
    bias_out = jnp.zeros((n_output,), jnp.float32)  # not used in forward
    return w_ih, w_hh, bias_h, w_out, bias_out


if __name__ == "__main__":
    # Hyperparameters consistent with the module (rule_name='decision_making').
    hp = dict(n_input=5, n_rnn=32, n_output=3, alpha=0.2, sigma_rec=0.05,
              activation="relu", initial_std=0.3)
    T, B = 8, 2

    key = jax.random.PRNGKey(0)
    k_params, k_x, k_state, k_noise = jax.random.split(key, 4)

    w_ih, w_hh, bias_h, _, _ = init_params(
        k_params, hp["n_input"], hp["n_rnn"], hp["n_output"], hp["initial_std"])

    x = jax.random.normal(k_x, (T, B, hp["n_input"]), jnp.float32)
    init_state = jax.random.normal(k_state, (B, hp["n_rnn"]), jnp.float32) * 0.1
    # torch.randn_like(state) per step -> pre-sampled deterministically as [T, B, H].
    noise = jax.random.normal(k_noise, (T, B, hp["n_rnn"]), jnp.float32)

    sigma_rec_eff = math.sqrt(2.0 / hp["alpha"]) * hp["sigma_rec"]

    ref = rnn_forward_ref(x, init_state, noise, w_ih, w_hh, bias_h,
                          alpha=hp["alpha"], sigma_rec=sigma_rec_eff,
                          activation=hp["activation"])

    # Exact (f32 MXU operands) path — tight tolerance.
    run_f32 = jax.jit(functools.partial(
        rnn_forward, alpha=hp["alpha"], sigma_rec=sigma_rec_eff,
        activation=hp["activation"], matmul_dtype=jnp.float32))
    out = jax.block_until_ready(run_f32(x, init_state, noise, w_ih, w_hh, bias_h))
    assert out.shape == (T + 1, B, hp["n_rnn"])
    assert jnp.allclose(out, ref, atol=1e-5, rtol=1e-4), "f32 mismatch vs reference"

    # bf16 MXU-operand path (f32 accumulation) — loose smoke check: rounding error
    # compounds through the T-step feedback, so it is not bit-exact by design.
    run_bf16 = jax.jit(functools.partial(
        rnn_forward, alpha=hp["alpha"], sigma_rec=sigma_rec_eff,
        activation=hp["activation"], matmul_dtype=jnp.bfloat16))
    out_bf16 = jax.block_until_ready(run_bf16(x, init_state, noise, w_ih, w_hh, bias_h))
    assert jnp.allclose(out_bf16, ref, atol=1e-1, rtol=1e-1), "bf16 path drifted too far"

    print("KERNEL_OK")
</pallas_src>

<mosaic_0001>
module attributes {stable_mosaic.version = 11 : i64} {
  func.func @kernel(%arg0: i32, %arg1: i32, %arg2: memref<8x8x128xf32, #tpu.memory_space<vmem>>, %arg3: memref<128x128xf32, #tpu.memory_space<vmem>>, %arg4: memref<8x128xf32, #tpu.memory_space<vmem>>, %arg5: memref<8x8x128xf32, #tpu.memory_space<vmem>>, %arg6: memref<8x128xf32, #tpu.memory_space<vmem>>) attributes {dimension_semantics = [#tpu.dimension_semantics<parallel>, #tpu.dimension_semantics<arbitrary>], iteration_bounds = array<i64: 1, 1>, scalar_prefetch = 0 : i64, scratch_operands = 1 : i64, tpu.core_type = #tpu.core_type<tc>, window_params = [{transform_indices = @transform_0, window_bounds = array<i64: 8, 8, 128>}, {pipeline_mode = #tpu.pipeline_mode<synchronous>, transform_indices = @transform_1, window_bounds = array<i64: 128, 128>}, {transform_indices = @transform_2, window_bounds = array<i64: 8, 128>}, {transform_indices = @transform_3, window_bounds = array<i64: 8, 8, 128>}]} {
    %c0_i32 = arith.constant 0 : i32
    %0 = arith.cmpi eq, %arg1, %c0_i32 : i32
    %1 = arith.extui %0 : i1 to i32
    %c0_i32_0 = arith.constant 0 : i32
    %2 = arith.cmpi ne, %1, %c0_i32_0 : i32
    scf.if %2 {
      %c0_76 = arith.constant 0 : index
      %c0_77 = arith.constant 0 : index
      %125 = vector.load %arg4[%c0_76, %c0_77] : memref<8x128xf32, #tpu.memory_space<vmem>>, vector<8x128xf32>
      %c0_78 = arith.constant 0 : index
      %c0_79 = arith.constant 0 : index
      %126 = vector.load %arg6[%c0_78, %c0_79] : memref<8x128xf32, #tpu.memory_space<vmem>>, vector<8x128xf32>
      tpu.vector_store %arg6[%c0_78, %c0_79], %125 {strides = array<i32>} : memref<8x128xf32, #tpu.memory_space<vmem>>, vector<8x128xf32>,
    } else {
    }
    %c0 = arith.constant 0 : index
    %c0_1 = arith.constant 0 : index
    %3 = vector.load %arg6[%c0, %c0_1] : memref<8x128xf32, #tpu.memory_space<vmem>>, vector<8x128xf32>
    %c0_i32_2 = arith.constant 0 : i32
    %cst = arith.constant 0.000000e+00 : f32
    %4 = vector.broadcast %cst : f32 to vector<8x128xf32>
    %5 = arith.maximumf %3, %4 : vector<8x128xf32>
    %cst_3 = arith.constant 8.000000e-01 : f32
    %6 = vector.broadcast %cst_3 : f32 to vector<8x128xf32>
    %7 = arith.mulf %6, %3 : vector<8x128xf32>
    %c0_4 = arith.constant 0 : index
    %c0_5 = arith.constant 0 : index
    %8 = vector.load %arg3[%c0_4, %c0_5] : memref<128x128xf32, #tpu.memory_space<vmem>>, vector<128x128xf32>
    %cst_6 = arith.constant dense<0.000000e+00> : vector<8x128xf32>
    %9 = tpu.matmul %5, %8, %cst_6 {dimension_numbers = #tpu.dot_dimension_numbers<[1], [0], [0], [1], [0, 0, 1, 1], [], []>} : vector<8x128xf32>, vector<128x128xf32>, vector<8x128xf32> -> vector<8x128xf32>
    %10 = arith.addf %7, %9 : vector<8x128xf32>
    %11 = arith.index_cast %c0_i32_2 : i32 to index
    %c0_7 = arith.constant 0 : index
    %c0_8 = arith.constant 0 : index
    %12 = vector.load %arg2[%11, %c0_7, %c0_8] : memref<8x8x128xf32, #tpu.memory_space<vmem>>, vector<1x8x128xf32>
    %13 = vector.shape_cast %12 : vector<1x8x128xf32> to vector<8x128xf32>
    %14 = arith.addf %10, %13 : vector<8x128xf32>
    %15 = arith.index_cast %c0_i32_2 : i32 to index
    %c0_9 = arith.constant 0 : index
    %c0_10 = arith.constant 0 : index
    %16 = vector.load %arg5[%15, %c0_9, %c0_10] : memref<8x8x128xf32, #tpu.memory_space<vmem>>, vector<1x8x128xf32>
    %17 = vector.shape_cast %16 : vector<1x8x128xf32> to vector<8x128xf32>
    %18 = vector.shape_cast %14 : vector<8x128xf32> to vector<1x8x128xf32>
    tpu.vector_store %arg5[%15, %c0_9, %c0_10], %18 {strides = array<i32>} : memref<8x8x128xf32, #tpu.memory_space<vmem>>, vector<1x8x128xf32>,
    %c1_i32 = arith.constant 1 : i32
    %cst_11 = arith.constant 0.000000e+00 : f32
    %19 = vector.broadcast %cst_11 : f32 to vector<8x128xf32>
    %20 = arith.maximumf %14, %19 : vector<8x128xf32>
    %cst_12 = arith.constant 8.000000e-01 : f32
    %21 = vector.broadcast %cst_12 : f32 to vector<8x128xf32>
    %22 = arith.mulf %21, %14 : vector<8x128xf32>
    %c0_13 = arith.constant 0 : index
    %c0_14 = arith.constant 0 : index
    %23 = vector.load %arg3[%c0_13, %c0_14] : memref<128x128xf32, #tpu.memory_space<vmem>>, vector<128x128xf32>
    %cst_15 = arith.constant dense<0.000000e+00> : vector<8x128xf32>
    %24 = tpu.matmul %20, %23, %cst_15 {dimension_numbers = #tpu.dot_dimension_numbers<[1], [0], [0], [1], [0, 0, 1, 1], [], []>} : vector<8x128xf32>, vector<128x128xf32>, vector<8x128xf32> -> vector<8x128xf32>
    %25 = arith.addf %22, %24 : vector<8x128xf32>
    %26 = arith.index_cast %c1_i32 : i32 to index
    %c0_16 = arith.constant 0 : index
    %c0_17 = arith.constant 0 : index
    %27 = vector.load %arg2[%26, %c0_16, %c0_17] : memref<8x8x128xf32, #tpu.memory_space<vmem>>, vector<1x8x128xf32>
    %28 = vector.shape_cast %27 : vector<1x8x128xf32> to vector<8x128xf32>
    %29 = arith.addf %25, %28 : vector<8x128xf32>
    %30 = arith.index_cast %c1_i32 : i32 to index
    %c0_18 = arith.constant 0 : index
    %c0_19 = arith.constant 0 : index
    %31 = vector.load %arg5[%30, %c0_18, %c0_19] : memref<8x8x128xf32, #tpu.memory_space<vmem>>, vector<1x8x128xf32>
    %32 = vector.shape_cast %31 : vector<1x8x128xf32> to vector<8x128xf32>
    %33 = vector.shape_cast %29 : vector<8x128xf32> to vector<1x8x128xf32>
    tpu.vector_store %arg5[%30, %c0_18, %c0_19], %33 {strides = array<i32>} : memref<8x8x128xf32, #tpu.memory_space<vmem>>, vector<1x8x128xf32>,
    %c2_i32 = arith.constant 2 : i32
    %cst_20 = arith.constant 0.000000e+00 : f32
    %34 = vector.broadcast %cst_20 : f32 to vector<8x128xf32>
    %35 = arith.maximumf %29, %34 : vector<8x128xf32>
    %cst_21 = arith.constant 8.000000e-01 : f32
    %36 = vector.broadcast %cst_21 : f32 to vector<8x128xf32>
    %37 = arith.mulf %36, %29 : vector<8x128xf32>
    %c0_22 = arith.constant 0 : index
    %c0_23 = arith.constant 0 : index
    %38 = vector.load %arg3[%c0_22, %c0_23] : memref<128x128xf32, #tpu.memory_space<vmem>>, vector<128x128xf32>
    %cst_24 = arith.constant dense<0.000000e+00> : vector<8x128xf32>
    %39 = tpu.matmul %35, %38, %cst_24 {dimension_numbers = #tpu.dot_dimension_numbers<[1], [0], [0], [1], [0, 0, 1, 1], [], []>} : vector<8x128xf32>, vector<128x128xf32>, vector<8x128xf32> -> vector<8x128xf32>
    %40 = arith.addf %37, %39 : vector<8x128xf32>
    %41 = arith.index_cast %c2_i32 : i32 to index
    %c0_25 = arith.constant 0 : index
    %c0_26 = arith.constant 0 : index
    %42 = vector.load %arg2[%41, %c0_25, %c0_26] : memref<8x8x128xf32, #tpu.memory_space<vmem>>, vector<1x8x128xf32>
    %43 = vector.shape_cast %42 : vector<1x8x128xf32> to vector<8x128xf32>
    %44 = arith.addf %40, %43 : vector<8x128xf32>
    %45 = arith.index_cast %c2_i32 : i32 to index
    %c0_27 = arith.constant 0 : index
    %c0_28 = arith.constant 0 : index
    %46 = vector.load %arg5[%45, %c0_27, %c0_28] : memref<8x8x128xf32, #tpu.memory_space<vmem>>, vector<1x8x128xf32>
    %47 = vector.shape_cast %46 : vector<1x8x128xf32> to vector<8x128xf32>
    %48 = vector.shape_cast %44 : vector<8x128xf32> to vector<1x8x128xf32>
    tpu.vector_store %arg5[%45, %c0_27, %c0_28], %48 {strides = array<i32>} : memref<8x8x128xf32, #tpu.memory_space<vmem>>, vector<1x8x128xf32>,
    %c3_i32 = arith.constant 3 : i32
    %cst_29 = arith.constant 0.000000e+00 : f32
    %49 = vector.broadcast %cst_29 : f32 to vector<8x128xf32>
    %50 = arith.maximumf %44, %49 : vector<8x128xf32>
    %cst_30 = arith.constant 8.000000e-01 : f32
    %51 = vector.broadcast %cst_30 : f32 to vector<8x128xf32>
    %52 = arith.mulf %51, %44 : vector<8x128xf32>
    %c0_31 = arith.constant 0 : index
    %c0_32 = arith.constant 0 : index
    %53 = vector.load %arg3[%c0_31, %c0_32] : memref<128x128xf32, #tpu.memory_space<vmem>>, vector<128x128xf32>
    %cst_33 = arith.constant dense<0.000000e+00> : vector<8x128xf32>
    %54 = tpu.matmul %50, %53, %cst_33 {dimension_numbers = #tpu.dot_dimension_numbers<[1], [0], [0], [1], [0, 0, 1, 1], [], []>} : vector<8x128xf32>, vector<128x128xf32>, vector<8x128xf32> -> vector<8x128xf32>
    %55 = arith.addf %52, %54 : vector<8x128xf32>
    %56 = arith.index_cast %c3_i32 : i32 to index
    %c0_34 = arith.constant 0 : index
    %c0_35 = arith.constant 0 : index
    %57 = vector.load %arg2[%56, %c0_34, %c0_35] : memref<8x8x128xf32, #tpu.memory_space<vmem>>, vector<1x8x128xf32>
    %58 = vector.shape_cast %57 : vector<1x8x128xf32> to vector<8x128xf32>
    %59 = arith.addf %55, %58 : vector<8x128xf32>
    %60 = arith.index_cast %c3_i32 : i32 to index
    %c0_36 = arith.constant 0 : index
    %c0_37 = arith.constant 0 : index
    %61 = vector.load %arg5[%60, %c0_36, %c0_37] : memref<8x8x128xf32, #tpu.memory_space<vmem>>, vector<1x8x128xf32>
    %62 = vector.shape_cast %61 : vector<1x8x128xf32> to vector<8x128xf32>
    %63 = vector.shape_cast %59 : vector<8x128xf32> to vector<1x8x128xf32>
    tpu.vector_store %arg5[%60, %c0_36, %c0_37], %63 {strides = array<i32>} : memref<8x8x128xf32, #tpu.memory_space<vmem>>, vector<1x8x128xf32>,
    %c4_i32 = arith.constant 4 : i32
    %cst_38 = arith.constant 0.000000e+00 : f32
    %64 = vector.broadcast %cst_38 : f32 to vector<8x128xf32>
    %65 = arith.maximumf %59, %64 : vector<8x128xf32>
    %cst_39 = arith.constant 8.000000e-01 : f32
    %66 = vector.broadcast %cst_39 : f32 to vector<8x128xf32>
    %67 = arith.mulf %66, %59 : vector<8x128xf32>
    %c0_40 = arith.constant 0 : index
    %c0_41 = arith.constant 0 : index
    %68 = vector.load %arg3[%c0_40, %c0_41] : memref<128x128xf32, #tpu.memory_space<vmem>>, vector<128x128xf32>
    %cst_42 = arith.constant dense<0.000000e+00> : vector<8x128xf32>
    %69 = tpu.matmul %65, %68, %cst_42 {dimension_numbers = #tpu.dot_dimension_numbers<[1], [0], [0], [1], [0, 0, 1, 1], [], []>} : vector<8x128xf32>, vector<128x128xf32>, vector<8x128xf32> -> vector<8x128xf32>
    %70 = arith.addf %67, %69 : vector<8x128xf32>
    %71 = arith.index_cast %c4_i32 : i32 to index
    %c0_43 = arith.constant 0 : index
    %c0_44 = arith.constant 0 : index
    %72 = vector.load %arg2[%71, %c0_43, %c0_44] : memref<8x8x128xf32, #tpu.memory_space<vmem>>, vector<1x8x128xf32>
    %73 = vector.shape_cast %72 : vector<1x8x128xf32> to vector<8x128xf32>
    %74 = arith.addf %70, %73 : vector<8x128xf32>
    %75 = arith.index_cast %c4_i32 : i32 to index
    %c0_45 = arith.constant 0 : index
    %c0_46 = arith.constant 0 : index
    %76 = vector.load %arg5[%75, %c0_45, %c0_46] : memref<8x8x128xf32, #tpu.memory_space<vmem>>, vector<1x8x128xf32>
    %77 = vector.shape_cast %76 : vector<1x8x128xf32> to vector<8x128xf32>
    %78 = vector.shape_cast %74 : vector<8x128xf32> to vector<1x8x128xf32>
    tpu.vector_store %arg5[%75, %c0_45, %c0_46], %78 {strides = array<i32>} : memref<8x8x128xf32, #tpu.memory_space<vmem>>, vector<1x8x128xf32>,
    %c5_i32 = arith.constant 5 : i32
    %cst_47 = arith.constant 0.000000e+00 : f32
    %79 = vector.broadcast %cst_47 : f32 to vector<8x128xf32>
    %80 = arith.maximumf %74, %79 : vector<8x128xf32>
    %cst_48 = arith.constant 8.000000e-01 : f32
    %81 = vector.broadcast %cst_48 : f32 to vector<8x128xf32>
    %82 = arith.mulf %81, %74 : vector<8x128xf32>
    %c0_49 = arith.constant 0 : index
    %c0_50 = arith.constant 0 : index
    %83 = vector.load %arg3[%c0_49, %c0_50] : memref<128x128xf32, #tpu.memory_space<vmem>>, vector<128x128xf32>
    %cst_51 = arith.constant dense<0.000000e+00> : vector<8x128xf32>
    %84 = tpu.matmul %80, %83, %cst_51 {dimension_numbers = #tpu.dot_dimension_numbers<[1], [0], [0], [1], [0, 0, 1, 1], [], []>} : vector<8x128xf32>, vector<128x128xf32>, vector<8x128xf32> -> vector<8x128xf32>
    %85 = arith.addf %82, %84 : vector<8x128xf32>
    %86 = arith.index_cast %c5_i32 : i32 to index
    %c0_52 = arith.constant 0 : index
    %c0_53 = arith.constant 0 : index
    %87 = vector.load %arg2[%86, %c0_52, %c0_53] : memref<8x8x128xf32, #tpu.memory_space<vmem>>, vector<1x8x128xf32>
    %88 = vector.shape_cast %87 : vector<1x8x128xf32> to vector<8x128xf32>
    %89 = arith.addf %85, %88 : vector<8x128xf32>
    %90 = arith.index_cast %c5_i32 : i32 to index
    %c0_54 = arith.constant 0 : index
    %c0_55 = arith.constant 0 : index
    %91 = vector.load %arg5[%90, %c0_54, %c0_55] : memref<8x8x128xf32, #tpu.memory_space<vmem>>, vector<1x8x128xf32>
    %92 = vector.shape_cast %91 : vector<1x8x128xf32> to vector<8x128xf32>
    %93 = vector.shape_cast %89 : vector<8x128xf32> to vector<1x8x128xf32>
    tpu.vector_store %arg5[%90, %c0_54, %c0_55], %93 {strides = array<i32>} : memref<8x8x128xf32, #tpu.memory_space<vmem>>, vector<1x8x128xf32>,
    %c6_i32 = arith.constant 6 : i32
    %cst_56 = arith.constant 0.000000e+00 : f32
    %94 = vector.broadcast %cst_56 : f32 to vector<8x128xf32>
    %95 = arith.maximumf %89, %94 : vector<8x128xf32>
    %cst_57 = arith.constant 8.000000e-01 : f32
    %96 = vector.broadcast %cst_57 : f32 to vector<8x128xf32>
    %97 = arith.mulf %96, %89 : vector<8x128xf32>
    %c0_58 = arith.constant 0 : index
    %c0_59 = arith.constant 0 : index
    %98 = vector.load %arg3[%c0_58, %c0_59] : memref<128x128xf32, #tpu.memory_space<vmem>>, vector<128x128xf32>
    %cst_60 = arith.constant dense<0.000000e+00> : vector<8x128xf32>
    %99 = tpu.matmul %95, %98, %cst_60 {dimension_numbers = #tpu.dot_dimension_numbers<[1], [0], [0], [1], [0, 0, 1, 1], [], []>} : vector<8x128xf32>, vector<128x128xf32>, vector<8x128xf32> -> vector<8x128xf32>
    %100 = arith.addf %97, %99 : vector<8x128xf32>
    %101 = arith.index_cast %c6_i32 : i32 to index
    %c0_61 = arith.constant 0 : index
    %c0_62 = arith.constant 0 : index
    %102 = vector.load %arg2[%101, %c0_61, %c0_62] : memref<8x8x128xf32, #tpu.memory_space<vmem>>, vector<1x8x128xf32>
    %103 = vector.shape_cast %102 : vector<1x8x128xf32> to vector<8x128xf32>
    %104 = arith.addf %100, %103 : vector<8x128xf32>
    %105 = arith.index_cast %c6_i32 : i32 to index
    %c0_63 = arith.constant 0 : index
    %c0_64 = arith.constant 0 : index
    %106 = vector.load %arg5[%105, %c0_63, %c0_64] : memref<8x8x128xf32, #tpu.memory_space<vmem>>, vector<1x8x128xf32>
    %107 = vector.shape_cast %106 : vector<1x8x128xf32> to vector<8x128xf32>
    %108 = vector.shape_cast %104 : vector<8x128xf32> to vector<1x8x128xf32>
    tpu.vector_store %arg5[%105, %c0_63, %c0_64], %108 {strides = array<i32>} : memref<8x8x128xf32, #tpu.memory_space<vmem>>, vector<1x8x128xf32>,
    %c7_i32 = arith.constant 7 : i32
    %cst_65 = arith.constant 0.000000e+00 : f32
    %109 = vector.broadcast %cst_65 : f32 to vector<8x128xf32>
    %110 = arith.maximumf %104, %109 : vector<8x128xf32>
    %cst_66 = arith.constant 8.000000e-01 : f32
    %111 = vector.broadcast %cst_66 : f32 to vector<8x128xf32>
    %112 = arith.mulf %111, %104 : vector<8x128xf32>
    %c0_67 = arith.constant 0 : index
    %c0_68 = arith.constant 0 : index
    %113 = vector.load %arg3[%c0_67, %c0_68] : memref<128x128xf32, #tpu.memory_space<vmem>>, vector<128x128xf32>
    %cst_69 = arith.constant dense<0.000000e+00> : vector<8x128xf32>
    %114 = tpu.matmul %110, %113, %cst_69 {dimension_numbers = #tpu.dot_dimension_numbers<[1], [0], [0], [1], [0, 0, 1, 1], [], []>} : vector<8x128xf32>, vector<128x128xf32>, vector<8x128xf32> -> vector<8x128xf32>
    %115 = arith.addf %112, %114 : vector<8x128xf32>
    %116 = arith.index_cast %c7_i32 : i32 to index
    %c0_70 = arith.constant 0 : index
    %c0_71 = arith.constant 0 : index
    %117 = vector.load %arg2[%116, %c0_70, %c0_71] : memref<8x8x128xf32, #tpu.memory_space<vmem>>, vector<1x8x128xf32>
    %118 = vector.shape_cast %117 : vector<1x8x128xf32> to vector<8x128xf32>
    %119 = arith.addf %115, %118 : vector<8x128xf32>
    %120 = arith.index_cast %c7_i32 : i32 to index
    %c0_72 = arith.constant 0 : index
    %c0_73 = arith.constant 0 : index
    %121 = vector.load %arg5[%120, %c0_72, %c0_73] : memref<8x8x128xf32, #tpu.memory_space<vmem>>, vector<1x8x128xf32>
    %122 = vector.shape_cast %121 : vector<1x8x128xf32> to vector<8x128xf32>
    %123 = vector.shape_cast %119 : vector<8x128xf32> to vector<1x8x128xf32>
    tpu.vector_store %arg5[%120, %c0_72, %c0_73], %123 {strides = array<i32>} : memref<8x8x128xf32, #tpu.memory_space<vmem>>, vector<1x8x128xf32>,
    %c8_i32 = arith.constant 8 : i32
    %c0_74 = arith.constant 0 : index
    %c0_75 = arith.constant 0 : index
    %124 = vector.load %arg6[%c0_74, %c0_75] : memref<8x128xf32, #tpu.memory_space<vmem>>, vector<8x128xf32>
    tpu.vector_store %arg6[%c0_74, %c0_75], %119 {strides = array<i32>} : memref<8x128xf32, #tpu.memory_space<vmem>>, vector<8x128xf32>,
    return
  }
  func.func @transform_0(%arg0: i32, %arg1: i32) -> (i32, i32, i32) {
    %c0_i32 = arith.constant 0 : i32
    %c0_i32_0 = arith.constant 0 : i32
    return %arg1, %arg0, %c0_i32 : i32, i32, i32
  }
  func.func @transform_1(%arg0: i32, %arg1: i32) -> (i32, i32) {
    %c0_i32 = arith.constant 0 : i32
    %c0_i32_0 = arith.constant 0 : i32
    %c0_i32_1 = arith.constant 0 : i32
    return %c0_i32, %c0_i32_0 : i32, i32
  }
  func.func @transform_2(%arg0: i32, %arg1: i32) -> (i32, i32) {
    %c0_i32 = arith.constant 0 : i32
    %c0_i32_0 = arith.constant 0 : i32
    return %arg0, %c0_i32 : i32, i32
  }
  func.func @transform_3(%arg0: i32, %arg1: i32) -> (i32, i32, i32) {
    %c0_i32 = arith.constant 0 : i32
    %c0_i32_0 = arith.constant 0 : i32
    return %arg1, %arg0, %c0_i32 : i32, i32, i32
  }
}

</mosaic_0001>

<llo_original>
// kernel: rnn_forward.1
$region0: #{rnn_forward.1}
  #allocation0 [shape = 'u32[]', space=smem, size = 0x4, offset = 0x4, fixed_abs, tag = 'smem constant byte address 0x4 - core index']
  #allocation1 [shape = 'u32[144,128]{1,0:T(1,128)}', space=vmem, size = 0x12000, scoped, tag = 'internal scratch']
  #allocation2 [shape = 'f32[8,128]{1,0:T(8,128)}', space=vmem, size = 0x1000, scoped, tag = 'scratch operand']
  %s0 = inlined_call_operand.vmem [shape: f32[8,8,128], index: 0, kind: input, shape index: {}]
  %s1 = inlined_call_operand.vmem [shape: f32[128,128], index: 1, kind: input, shape index: {}]
  %s2 = inlined_call_operand.vmem [shape: f32[8,128], index: 2, kind: input, shape index: {}]
  %s3 = inlined_call_operand.vmem [shape: f32[8,8,128], index: 3, kind: output, shape index: {}]
  %s4 = sld [smem:[#allocation0]]
  $region26: #{rnn_forward.1} parent=0
    _
  %s6 = ssub.s32 1, %s4
  %s7 = scalar_select 0, %s6, %s4
  // Predicated region
  $region2: #{rnn_forward.1} parent=0 // pred_check
    _
  $region3: #{rnn_forward.1} parent=0 // pred_check_branch
    %9 = sbr.rel (0) target = $region5
  $region4: #{rnn_forward.1} parent=0 // pred_region
    _
  $region5: #{rnn_forward.1} parent=0 // pred_fallthru
    _
  // Predicated region
  $region6: #{rnn_forward.1} parent=0 // pred_check
    _
  $region7: #{rnn_forward.1} parent=0 // pred_check_branch
    %11 = sbr.rel (0) target = $region9
  $region8: #{rnn_forward.1} parent=0 // pred_region
    _
  $region9: #{rnn_forward.1} parent=0 // pred_fallthru
    _
  // Predicated region
  $region10: #{rnn_forward.1} parent=0 // pred_check
    _
  $region11: #{rnn_forward.1} parent=0 // pred_check_branch
    %13 = sbr.rel (0) target = $region13
  $region12: #{rnn_forward.1} parent=0 // pred_region
    _
  $region13: #{rnn_forward.1} parent=0 // pred_fallthru
    _
  %p14 = scmp.eq.s32.totalorder 0, 0
  // Predicated region
  $region14: #{rnn_forward.1} parent=0 // pred_check
    %p15 = pneg %p14
  $region15: #{rnn_forward.1} parent=0 // pred_check_branch
    %17 = sbr.rel (%p15) target = $region17
  $region16: #{rnn_forward.1} parent=0 // pred_region
    %v18 = vld [vmem:[%s2] sm:$0xff]
    %19 = vst [vmem:[#allocation2] sm:$0xff] %v18
  $region17: #{rnn_forward.1} parent=0 // pred_fallthru
    _
  %v20 = vld [vmem:[#allocation2] sm:$0xff]
  %v21 = vmax.f32 %v20, 0.0
  %v22 = vmul.f32 %v20, 0.8
  %v23 = vld [vmem:[%s1] sm:$0xff]
  %v24 = vld [vmem:[%s1 + $0x8] sm:$0xff]
  %v25 = vld [vmem:[%s1 + $0x10] sm:$0xff]
  %v26 = vld [vmem:[%s1 + $0x18] sm:$0xff]
  %v27 = vld [vmem:[%s1 + $0x20] sm:$0xff]
  %v28 = vld [vmem:[%s1 + $0x28] sm:$0xff]
  %v29 = vld [vmem:[%s1 + $0x30] sm:$0xff]
  %v30 = vld [vmem:[%s1 + $0x38] sm:$0xff]
  %v31 = vld [vmem:[%s1 + $0x40] sm:$0xff]
  %v32 = vld [vmem:[%s1 + $0x48] sm:$0xff]
  %v33 = vld [vmem:[%s1 + $0x50] sm:$0xff]
  %v34 = vld [vmem:[%s1 + $0x58] sm:$0xff]
  %v35 = vld [vmem:[%s1 + $0x60] sm:$0xff]
  %v36 = vld [vmem:[%s1 + $0x68] sm:$0xff]
  %v37 = vld [vmem:[%s1 + $0x70] sm:$0xff]
  %v38 = vld [vmem:[%s1 + $0x78] sm:$0xff]
  %39 = vmatprep.subr.mxu0 0.0
  %40 = vmatpush1.msra.mxu0 %v23
  %41 = vmatprep.subr.mxu0 0.0
  %42 = vmatpush1.msra.mxu0 %v24
  %43 = vmatprep.subr.mxu0 0.0
  %44 = vmatpush1.msra.mxu0 %v25
  %45 = vmatprep.subr.mxu0 0.0
  %46 = vmatpush1.msra.mxu0 %v26
  %47 = vmatprep.subr.mxu0 0.0
  %48 = vmatpush1.msra.mxu0 %v27
  %49 = vmatprep.subr.mxu0 0.0
  %50 = vmatpush1.msra.mxu0 %v28
  %51 = vmatprep.subr.mxu0 0.0
  %52 = vmatpush1.msra.mxu0 %v29
  %53 = vmatprep.subr.mxu0 0.0
  %54 = vmatpush1.msra.mxu0 %v30
  %55 = vmatprep.subr.mxu0 0.0
  %56 = vmatpush1.msra.mxu0 %v31
  %57 = vmatprep.subr.mxu0 0.0
  %58 = vmatpush1.msra.mxu0 %v32
  %59 = vmatprep.subr.mxu0 0.0
  %60 = vmatpush1.msra.mxu0 %v33
  %61 = vmatprep.subr.mxu0 0.0
  %62 = vmatpush1.msra.mxu0 %v34
  %63 = vmatprep.subr.mxu0 0.0
  %64 = vmatpush1.msra.mxu0 %v35
  %65 = vmatprep.subr.mxu0 0.0
  %66 = vmatpush1.msra.mxu0 %v36
  %67 = vmatprep.subr.mxu0 0.0
  %68 = vmatpush1.msra.mxu0 %v37
  %69 = vmatprep.subr.mxu0 0.0
  %70 = vmatpush1.msra.mxu0 %v38
  %71 = vmatprep.subr.mxu0 0.0
  %72 = vmatpush1.msra.mxu0 0.0
  %73 = vmatprep.subr.mxu0 0.0
  %74 = vmatpush1.msra.mxu0 0.0
  %75 = vmatprep.subr.mxu0 0.0
  %76 = vmatpush1.msra.mxu0 0.0
  %77 = vmatprep.subr.mxu0 0.0
  %78 = vmatpush1.msra.mxu0 0.0
  %79 = vmatprep.subr.mxu0 0.0
  %80 = vmatpush1.msra.mxu0 0.0
  %81 = vmatprep.subr.mxu0 0.0
  %82 = vmatpush1.msra.mxu0 0.0
  %83 = vmatprep.subr.mxu0 0.0
  %84 = vmatpush1.msra.mxu0 0.0
  %85 = vmatprep.subr.mxu0 0.0
  %86 = vmatpush1.msra.mxu0 0.0
  %87 = vmatprep.subr.mxu0 0.0
  %88 = vmatpush1.msra.mxu0 0.0
  %89 = vmatprep.subr.mxu0 0.0
  %90 = vmatpush1.msra.mxu0 0.0
  %91 = vmatprep.subr.mxu0 0.0
  %92 = vmatpush1.msra.mxu0 0.0
  %93 = vmatprep.subr.mxu0 0.0
  %94 = vmatpush1.msra.mxu0 0.0
  %95 = vmatprep.subr.mxu0 0.0
  %96 = vmatpush1.msra.mxu0 0.0
  %97 = vmatprep.subr.mxu0 0.0
  %98 = vmatpush1.msra.mxu0 0.0
  %99 = vmatprep.subr.mxu0 0.0
  %100 = vmatpush1.msra.mxu0 0.0
  %101 = vmatprep.subr.mxu0 0.0
  %102 = vmatpush1.msra.mxu0 0.0
  %103 = vmatprep.mubr.f32.mxu0 0.0
  %104 = vmatmul.mubr.f32.gmra.mrb[0].mxu0 %v21
  %v105 = vpop.f32.mrb[0].mxu0
  %v106 = vadd.f32 0.0, %v105
  %v107 = vpop.f32.mrb[0].mxu0
  %108 = vdwg.mxu0
  %v109 = vadd.f32 %v22, %v106
  %v110 = vld [vmem:[%s0] sm:$0xff]
  %v111 = vadd.f32 %v109, %v110
  %112 = vst [vmem:[%s3] sm:$0xff] %v111
  %v113 = vmax.f32 %v111, 0.0
  %v114 = vmul.f32 %v111, 0.8
  %v115 = vld [vmem:[%s1] sm:$0xff]
  %v116 = vld [vmem:[%s1 + $0x8] sm:$0xff]
  %v117 = vld [vmem:[%s1 + $0x10] sm:$0xff]
  %v118 = vld [vmem:[%s1 + $0x18] sm:$0xff]
  %v119 = vld [vmem:[%s1 + $0x20] sm:$0xff]
  %v120 = vld [vmem:[%s1 + $0x28] sm:$0xff]
  %v121 = vld [vmem:[%s1 + $0x30] sm:$0xff]
  %v122 = vld [vmem:[%s1 + $0x38] sm:$0xff]
  %v123 = vld [vmem:[%s1 + $0x40] sm:$0xff]
  %v124 = vld [vmem:[%s1 + $0x48] sm:$0xff]
  %v125 = vld [vmem:[%s1 + $0x50] sm:$0xff]
  %v126 = vld [vmem:[%s1 + $0x58] sm:$0xff]
  %v127 = vld [vmem:[%s1 + $0x60] sm:$0xff]
  %v128 = vld [vmem:[%s1 + $0x68] sm:$0xff]
  %v129 = vld [vmem:[%s1 + $0x70] sm:$0xff]
  %v130 = vld [vmem:[%s1 + $0x78] sm:$0xff]
  %131 = vmatprep.subr.mxu0 0.0
  %132 = vmatpush1.msra.mxu0 %v115
  %133 = vmatprep.subr.mxu0 0.0
  %134 = vmatpush1.msra.mxu0 %v116
  %135 = vmatprep.subr.mxu0 0.0
  %136 = vmatpush1.msra.mxu0 %v117
  %137 = vmatprep.subr.mxu0 0.0
  %138 = vmatpush1.msra.mxu0 %v118
  %139 = vmatprep.subr.mxu0 0.0
  %140 = vmatpush1.msra.mxu0 %v119
  %141 = vmatprep.subr.mxu0 0.0
  %142 = vmatpush1.msra.mxu0 %v120
  %143 = vmatprep.subr.mxu0 0.0
  %144 = vmatpush1.msra.mxu0 %v121
  %145 = vmatprep.subr.mxu0 0.0
  %146 = vmatpush1.msra.mxu0 %v122
  %147 = vmatprep.subr.mxu0 0.0
  %148 = vmatpush1.msra.mxu0 %v123
  %149 = vmatprep.subr.mxu0 0.0
  %150 = vmatpush1.msra.mxu0 %v124
  %151 = vmatprep.subr.mxu0 0.0
  %152 = vmatpush1.msra.mxu0 %v125
  %153 = vmatprep.subr.mxu0 0.0
  %154 = vmatpush1.msra.mxu0 %v126
  %155 = vmatprep.subr.mxu0 0.0
  %156 = vmatpush1.msra.mxu0 %v127
  %157 = vmatprep.subr.mxu0 0.0
  %158 = vmatpush1.msra.mxu0 %v128
  %159 = vmatprep.subr.mxu0 0.0
  %160 = vmatpush1.msra.mxu0 %v129
  %161 = vmatprep.subr.mxu0 0.0
  %162 = vmatpush1.msra.mxu0 %v130
  %163 = vmatprep.subr.mxu0 0.0
  %164 = vmatpush1.msra.mxu0 0.0
  %165 = vmatprep.subr.mxu0 0.0
  %166 = vmatpush1.msra.mxu0 0.0
  %167 = vmatprep.subr.mxu0 0.0
  %168 = vmatpush1.msra.mxu0 0.0
  %169 = vmatprep.subr.mxu0 0.0
  %170 = vmatpush1.msra.mxu0 0.0
  %171 = vmatprep.subr.mxu0 0.0
  %172 = vmatpush1.msra.mxu0 0.0
  %173 = vmatprep.subr.mxu0 0.0
  %174 = vmatpush1.msra.mxu0 0.0
  %175 = vmatprep.subr.mxu0 0.0
  %176 = vmatpush1.msra.mxu0 0.0
  %177 = vmatprep.subr.mxu0 0.0
  %178 = vmatpush1.msra.mxu0 0.0
  %179 = vmatprep.subr.mxu0 0.0
  %180 = vmatpush1.msra.mxu0 0.0
  %181 = vmatprep.subr.mxu0 0.0
  %182 = vmatpush1.msra.mxu0 0.0
  %183 = vmatprep.subr.mxu0 0.0
  %184 = vmatpush1.msra.mxu0 0.0
  %185 = vmatprep.subr.mxu0 0.0
  %186 = vmatpush1.msra.mxu0 0.0
  %187 = vmatprep.subr.mxu0 0.0
  %188 = vmatpush1.msra.mxu0 0.0
  %189 = vmatprep.subr.mxu0 0.0
  %190 = vmatpush1.msra.mxu0 0.0
  %191 = vmatprep.subr.mxu0 0.0
  %192 = vmatpush1.msra.mxu0 0.0
  %193 = vmatprep.subr.mxu0 0.0
  %194 = vmatpush1.msra.mxu0 0.0
  %195 = vmatprep.mubr.f32.mxu0 0.0
  %196 = vmatmul.mubr.f32.gmra.mrb[0].mxu0 %v113
  %v197 = vpop.f32.mrb[0].mxu0
  %v198 = vadd.f32 0.0, %v197
  %v199 = vpop.f32.mrb[0].mxu0
  %200 = vdwg.mxu0
  %v201 = vadd.f32 %v114, %v198
  %s202 = scalar_lea.vmem %s0, 8
  %v203 = vld [vmem:[%s202] sm:$0xff]
  %v204 = vadd.f32 %v201, %v203
  %s205 = scalar_lea.vmem %s3, 8
  %206 = vst [vmem:[%s205] sm:$0xff] %v204
  %v207 = vmax.f32 %v204, 0.0
  %v208 = vmul.f32 %v204, 0.8
  %v209 = vld [vmem:[%s1] sm:$0xff]
  %v210 = vld [vmem:[%s1 + $0x8] sm:$0xff]
  %v211 = vld [vmem:[%s1 + $0x10] sm:$0xff]
  %v212 = vld [vmem:[%s1 + $0x18] sm:$0xff]
  %v213 = vld [vmem:[%s1 + $0x20] sm:$0xff]
  %v214 = vld [vmem:[%s1 + $0x28] sm:$0xff]
  %v215 = vld [vmem:[%s1 + $0x30] sm:$0xff]
  %v216 = vld [vmem:[%s1 + $0x38] sm:$0xff]
  %v217 = vld [vmem:[%s1 + $0x40] sm:$0xff]
  %v218 = vld [vmem:[%s1 + $0x48] sm:$0xff]
  %v219 = vld [vmem:[%s1 + $0x50] sm:$0xff]
  %v220 = vld [vmem:[%s1 + $0x58] sm:$0xff]
  %v221 = vld [vmem:[%s1 + $0x60] sm:$0xff]
  %v222 = vld [vmem:[%s1 + $0x68] sm:$0xff]
  %v223 = vld [vmem:[%s1 + $0x70] sm:$0xff]
  %v224 = vld [vmem:[%s1 + $0x78] sm:$0xff]
  %225 = vmatprep.subr.mxu0 0.0
  %226 = vmatpush1.msra.mxu0 %v209
  %227 = vmatprep.subr.mxu0 0.0
  %228 = vmatpush1.msra.mxu0 %v210
  %229 = vmatprep.subr.mxu0 0.0
  %230 = vmatpush1.msra.mxu0 %v211
  %231 = vmatprep.subr.mxu0 0.0
  %232 = vmatpush1.msra.mxu0 %v212
  %233 = vmatprep.subr.mxu0 0.0
  %234 = vmatpush1.msra.mxu0 %v213
  %235 = vmatprep.subr.mxu0 0.0
  %236 = vmatpush1.msra.mxu0 %v214
  %237 = vmatprep.subr.mxu0 0.0
  %238 = vmatpush1.msra.mxu0 %v215
  %239 = vmatprep.subr.mxu0 0.0
  %240 = vmatpush1.msra.mxu0 %v216
  %241 = vmatprep.subr.mxu0 0.0
  %242 = vmatpush1.msra.mxu0 %v217
  %243 = vmatprep.subr.mxu0 0.0
  %244 = vmatpush1.msra.mxu0 %v218
  %245 = vmatprep.subr.mxu0 0.0
  %246 = vmatpush1.msra.mxu0 %v219
  %247 = vmatprep.subr.mxu0 0.0
  %248 = vmatpush1.msra.mxu0 %v220
  %249 = vmatprep.subr.mxu0 0.0
  %250 = vmatpush1.msra.mxu0 %v221
  %251 = vmatprep.subr.mxu0 0.0
  %252 = vmatpush1.msra.mxu0 %v222
  %253 = vmatprep.subr.mxu0 0.0
  %254 = vmatpush1.msra.mxu0 %v223
  %255 = vmatprep.subr.mxu0 0.0
  %256 = vmatpush1.msra.mxu0 %v224
  %257 = vmatprep.subr.mxu0 0.0
  %258 = vmatpush1.msra.mxu0 0.0
  %259 = vmatprep.subr.mxu0 0.0
  %260 = vmatpush1.msra.mxu0 0.0
  %261 = vmatprep.subr.mxu0 0.0
  %262 = vmatpush1.msra.mxu0 0.0
  %263 = vmatprep.subr.mxu0 0.0
  %264 = vmatpush1.msra.mxu0 0.0
  %265 = vmatprep.subr.mxu0 0.0
  %266 = vmatpush1.msra.mxu0 0.0
  %267 = vmatprep.subr.mxu0 0.0
  %268 = vmatpush1.msra.mxu0 0.0
  %269 = vmatprep.subr.mxu0 0.0
  %270 = vmatpush1.msra.mxu0 0.0
  %271 = vmatprep.subr.mxu0 0.0
  %272 = vmatpush1.msra.mxu0 0.0
  %273 = vmatprep.subr.mxu0 0.0
  %274 = vmatpush1.msra.mxu0 0.0
  %275 = vmatprep.subr.mxu0 0.0
  %276 = vmatpush1.msra.mxu0 0.0
  %277 = vmatprep.subr.mxu0 0.0
  %278 = vmatpush1.msra.mxu0 0.0
  %279 = vmatprep.subr.mxu0 0.0
  %280 = vmatpush1.msra.mxu0 0.0
  %281 = vmatprep.subr.mxu0 0.0
  %282 = vmatpush1.msra.mxu0 0.0
  %283 = vmatprep.subr.mxu0 0.0
  %284 = vmatpush1.msra.mxu0 0.0
  %285 = vmatprep.subr.mxu0 0.0
  %286 = vmatpush1.msra.mxu0 0.0
  %287 = vmatprep.subr.mxu0 0.0
  %288 = vmatpush1.msra.mxu0 0.0
  %289 = vmatprep.mubr.f32.mxu0 0.0
  %290 = vmatmul.mubr.f32.gmra.mrb[0].mxu0 %v207
  %v291 = vpop.f32.mrb[0].mxu0
  %v292 = vadd.f32 0.0, %v291
  %v293 = vpop.f32.mrb[0].mxu0
  %294 = vdwg.mxu0
  %v295 = vadd.f32 %v208, %v292
  %s296 = scalar_lea.vmem %s0, 16
  %v297 = vld [vmem:[%s296] sm:$0xff]
  %v298 = vadd.f32 %v295, %v297
  %s299 = scalar_lea.vmem %s3, 16
  %300 = vst [vmem:[%s299] sm:$0xff] %v298
  %v301 = vmax.f32 %v298, 0.0
  %v302 = vmul.f32 %v298, 0.8
  %v303 = vld [vmem:[%s1] sm:$0xff]
  %v304 = vld [vmem:[%s1 + $0x8] sm:$0xff]
  %v305 = vld [vmem:[%s1 + $0x10] sm:$0xff]
  %v306 = vld [vmem:[%s1 + $0x18] sm:$0xff]
  %v307 = vld [vmem:[%s1 + $0x20] sm:$0xff]
  %v308 = vld [vmem:[%s1 + $0x28] sm:$0xff]
  %v309 = vld [vmem:[%s1 + $0x30] sm:$0xff]
  %v310 = vld [vmem:[%s1 + $0x38] sm:$0xff]
  %v311 = vld [vmem:[%s1 + $0x40] sm:$0xff]
  %v312 = vld [vmem:[%s1 + $0x48] sm:$0xff]
  %v313 = vld [vmem:[%s1 + $0x50] sm:$0xff]
  %v314 = vld [vmem:[%s1 + $0x58] sm:$0xff]
  %v315 = vld [vmem:[%s1 + $0x60] sm:$0xff]
  %v316 = vld [vmem:[%s1 + $0x68] sm:$0xff]
  %v317 = vld [vmem:[%s1 + $0x70] sm:$0xff]
  %v318 = vld [vmem:[%s1 + $0x78] sm:$0xff]
  %319 = vmatprep.subr.mxu0 0.0
  %320 = vmatpush1.msra.mxu0 %v303
  %321 = vmatprep.subr.mxu0 0.0
  %322 = vmatpush1.msra.mxu0 %v304
  %323 = vmatprep.subr.mxu0 0.0
  %324 = vmatpush1.msra.mxu0 %v305
  %325 = vmatprep.subr.mxu0 0.0
  %326 = vmatpush1.msra.mxu0 %v306
  %327 = vmatprep.subr.mxu0 0.0
  %328 = vmatpush1.msra.mxu0 %v307
  %329 = vmatprep.subr.mxu0 0.0
  %330 = vmatpush1.msra.mxu0 %v308
  %331 = vmatprep.subr.mxu0 0.0
  %332 = vmatpush1.msra.mxu0 %v309
  %333 = vmatprep.subr.mxu0 0.0
  %334 = vmatpush1.msra.mxu0 %v310
  %335 = vmatprep.subr.mxu0 0.0
  %336 = vmatpush1.msra.mxu0 %v311
  %337 = vmatprep.subr.mxu0 0.0
  %338 = vmatpush1.msra.mxu0 %v312
  %339 = vmatprep.subr.mxu0 0.0
  %340 = vmatpush1.msra.mxu0 %v313
  %341 = vmatprep.subr.mxu0 0.0
  %342 = vmatpush1.msra.mxu0 %v314
  %343 = vmatprep.subr.mxu0 0.0
  %344 = vmatpush1.msra.mxu0 %v315
  %345 = vmatprep.subr.mxu0 0.0
  %346 = vmatpush1.msra.mxu0 %v316
  %347 = vmatprep.subr.mxu0 0.0
  %348 = vmatpush1.msra.mxu0 %v317
  %349 = vmatprep.subr.mxu0 0.0
  %350 = vmatpush1.msra.mxu0 %v318
  %351 = vmatprep.subr.mxu0 0.0
  %352 = vmatpush1.msra.mxu0 0.0
  %353 = vmatprep.subr.mxu0 0.0
  %354 = vmatpush1.msra.mxu0 0.0
  %355 = vmatprep.subr.mxu0 0.0
  %356 = vmatpush1.msra.mxu0 0.0
  %357 = vmatprep.subr.mxu0 0.0
  %358 = vmatpush1.msra.mxu0 0.0
  %359 = vmatprep.subr.mxu0 0.0
  %360 = vmatpush1.msra.mxu0 0.0
  %361 = vmatprep.subr.mxu0 0.0
  %362 = vmatpush1.msra.mxu0 0.0
  %363 = vmatprep.subr.mxu0 0.0
  %364 = vmatpush1.msra.mxu0 0.0
  %365 = vmatprep.subr.mxu0 0.0
  %366 = vmatpush1.msra.mxu0 0.0
  %367 = vmatprep.subr.mxu0 0.0
  %368 = vmatpush1.msra.mxu0 0.0
  %369 = vmatprep.subr.mxu0 0.0
  %370 = vmatpush1.msra.mxu0 0.0
  %371 = vmatprep.subr.mxu0 0.0
  %372 = vmatpush1.msra.mxu0 0.0
  %373 = vmatprep.subr.mxu0 0.0
  %374 = vmatpush1.msra.mxu0 0.0
  %375 = vmatprep.subr.mxu0 0.0
  %376 = vmatpush1.msra.mxu0 0.0
  %377 = vmatprep.subr.mxu0 0.0
  %378 = vmatpush1.msra.mxu0 0.0
  %379 = vmatprep.subr.mxu0 0.0
  %380 = vmatpush1.msra.mxu0 0.0
  %381 = vmatprep.subr.mxu0 0.0
  %382 = vmatpush1.msra.mxu0 0.0
  %383 = vmatprep.mubr.f32.mxu0 0.0
  %384 = vmatmul.mubr.f32.gmra.mrb[0].mxu0 %v301
  %v385 = vpop.f32.mrb[0].mxu0
  %v386 = vadd.f32 0.0, %v385
  %v387 = vpop.f32.mrb[0].mxu0
  %388 = vdwg.mxu0
  %v389 = vadd.f32 %v302, %v386
  %s390 = scalar_lea.vmem %s0, 24
  %v391 = vld [vmem:[%s390] sm:$0xff]
  %v392 = vadd.f32 %v389, %v391
  %s393 = scalar_lea.vmem %s3, 24
  %394 = vst [vmem:[%s393] sm:$0xff] %v392
  %v395 = vmax.f32 %v392, 0.0
  %v396 = vmul.f32 %v392, 0.8
  %v397 = vld [vmem:[%s1] sm:$0xff]
  %v398 = vld [vmem:[%s1 + $0x8] sm:$0xff]
  %v399 = vld [vmem:[%s1 + $0x10] sm:$0xff]
  %v400 = vld [vmem:[%s1 + $0x18] sm:$0xff]
  %v401 = vld [vmem:[%s1 + $0x20] sm:$0xff]
  %v402 = vld [vmem:[%s1 + $0x28] sm:$0xff]
  %v403 = vld [vmem:[%s1 + $0x30] sm:$0xff]
  %v404 = vld [vmem:[%s1 + $0x38] sm:$0xff]
  %v405 = vld [vmem:[%s1 + $0x40] sm:$0xff]
  %v406 = vld [vmem:[%s1 + $0x48] sm:$0xff]
  %v407 = vld [vmem:[%s1 + $0x50] sm:$0xff]
  %v408 = vld [vmem:[%s1 + $0x58] sm:$0xff]
  %v409 = vld [vmem:[%s1 + $0x60] sm:$0xff]
  %v410 = vld [vmem:[%s1 + $0x68] sm:$0xff]
  %v411 = vld [vmem:[%s1 + $0x70] sm:$0xff]
  %v412 = vld [vmem:[%s1 + $0x78] sm:$0xff]
  %413 = vmatprep.subr.mxu0 0.0
  %414 = vmatpush1.msra.mxu0 %v397
  %415 = vmatprep.subr.mxu0 0.0
  %416 = vmatpush1.msra.mxu0 %v398
  %417 = vmatprep.subr.mxu0 0.0
  %418 = vmatpush1.msra.mxu0 %v399
  %419 = vmatprep.subr.mxu0 0.0
  %420 = vmatpush1.msra.mxu0 %v400
  %421 = vmatprep.subr.mxu0 0.0
  %422 = vmatpush1.msra.mxu0 %v401
  %423 = vmatprep.subr.mxu0 0.0
  %424 = vmatpush1.msra.mxu0 %v402
  %425 = vmatprep.subr.mxu0 0.0
  %426 = vmatpush1.msra.mxu0 %v403
  %427 = vmatprep.subr.mxu0 0.0
  %428 = vmatpush1.msra.mxu0 %v404
  %429 = vmatprep.subr.mxu0 0.0
  %430 = vmatpush1.msra.mxu0 %v405
  %431 = vmatprep.subr.mxu0 0.0
  %432 = vmatpush1.msra.mxu0 %v406
  %433 = vmatprep.subr.mxu0 0.0
  %434 = vmatpush1.msra.mxu0 %v407
  %435 = vmatprep.subr.mxu0 0.0
  %436 = vmatpush1.msra.mxu0 %v408
  %437 = vmatprep.subr.mxu0 0.0
  %438 = vmatpush1.msra.mxu0 %v409
  %439 = vmatprep.subr.mxu0 0.0
  %440 = vmatpush1.msra.mxu0 %v410
  %441 = vmatprep.subr.mxu0 0.0
  %442 = vmatpush1.msra.mxu0 %v411
  %443 = vmatprep.subr.mxu0 0.0
  %444 = vmatpush1.msra.mxu0 %v412
  %445 = vmatprep.subr.mxu0 0.0
  %446 = vmatpush1.msra.mxu0 0.0
  %447 = vmatprep.subr.mxu0 0.0
  %448 = vmatpush1.msra.mxu0 0.0
  %449 = vmatprep.subr.mxu0 0.0
  %450 = vmatpush1.msra.mxu0 0.0
  %451 = vmatprep.subr.mxu0 0.0
  %452 = vmatpush1.msra.mxu0 0.0
  %453 = vmatprep.subr.mxu0 0.0
  %454 = vmatpush1.msra.mxu0 0.0
  %455 = vmatprep.subr.mxu0 0.0
  %456 = vmatpush1.msra.mxu0 0.0
  %457 = vmatprep.subr.mxu0 0.0
  %458 = vmatpush1.msra.mxu0 0.0
  %459 = vmatprep.subr.mxu0 0.0
  %460 = vmatpush1.msra.mxu0 0.0
  %461 = vmatprep.subr.mxu0 0.0
  %462 = vmatpush1.msra.mxu0 0.0
  %463 = vmatprep.subr.mxu0 0.0
  %464 = vmatpush1.msra.mxu0 0.0
  %465 = vmatprep.subr.mxu0 0.0
  %466 = vmatpush1.msra.mxu0 0.0
  %467 = vmatprep.subr.mxu0 0.0
  %468 = vmatpush1.msra.mxu0 0.0
  %469 = vmatprep.subr.mxu0 0.0
  %470 = vmatpush1.msra.mxu0 0.0
  %471 = vmatprep.subr.mxu0 0.0
  %472 = vmatpush1.msra.mxu0 0.0
  %473 = vmatprep.subr.mxu0 0.0
  %474 = vmatpush1.msra.mxu0 0.0
  %475 = vmatprep.subr.mxu0 0.0
  %476 = vmatpush1.msra.mxu0 0.0
  %477 = vmatprep.mubr.f32.mxu0 0.0
  %478 = vmatmul.mubr.f32.gmra.mrb[0].mxu0 %v395
  %v479 = vpop.f32.mrb[0].mxu0
  %v480 = vadd.f32 0.0, %v479
  %v481 = vpop.f32.mrb[0].mxu0
  %482 = vdwg.mxu0
  %v483 = vadd.f32 %v396, %v480
  %s484 = scalar_lea.vmem %s0, 32
  %v485 = vld [vmem:[%s484] sm:$0xff]
  %v486 = vadd.f32 %v483, %v485
  %s487 = scalar_lea.vmem %s3, 32
  %488 = vst [vmem:[%s487] sm:$0xff] %v486
  %v489 = vmax.f32 %v486, 0.0
  %v490 = vmul.f32 %v486, 0.8
  %v491 = vld [vmem:[%s1] sm:$0xff]
  %v492 = vld [vmem:[%s1 + $0x8] sm:$0xff]
  %v493 = vld [vmem:[%s1 + $0x10] sm:$0xff]
  %v494 = vld [vmem:[%s1 + $0x18] sm:$0xff]
  %v495 = vld [vmem:[%s1 + $0x20] sm:$0xff]
  %v496 = vld [vmem:[%s1 + $0x28] sm:$0xff]
  %v497 = vld [vmem:[%s1 + $0x30] sm:$0xff]
  %v498 = vld [vmem:[%s1 + $0x38] sm:$0xff]
  %v499 = vld [vmem:[%s1 + $0x40] sm:$0xff]
  %v500 = vld [vmem:[%s1 + $0x48] sm:$0xff]
  %v501 = vld [vmem:[%s1 + $0x50] sm:$0xff]
  %v502 = vld [vmem:[%s1 + $0x58] sm:$0xff]
  %v503 = vld [vmem:[%s1 + $0x60] sm:$0xff]
  %v504 = vld [vmem:[%s1 + $0x68] sm:$0xff]
  %v505 = vld [vmem:[%s1 + $0x70] sm:$0xff]
  %v506 = vld [vmem:[%s1 + $0x78] sm:$0xff]
  %507 = vmatprep.subr.mxu0 0.0
  %508 = vmatpush1.msra.mxu0 %v491
  %509 = vmatprep.subr.mxu0 0.0
  %510 = vmatpush1.msra.mxu0 %v492
  %511 = vmatprep.subr.mxu0 0.0
  %512 = vmatpush1.msra.mxu0 %v493
  %513 = vmatprep.subr.mxu0 0.0
  %514 = vmatpush1.msra.mxu0 %v494
  %515 = vmatprep.subr.mxu0 0.0
  %516 = vmatpush1.msra.mxu0 %v495
  %517 = vmatprep.subr.mxu0 0.0
  %518 = vmatpush1.msra.mxu0 %v496
  %519 = vmatprep.subr.mxu0 0.0
  %520 = vmatpush1.msra.mxu0 %v497
  %521 = vmatprep.subr.mxu0 0.0
  %522 = vmatpush1.msra.mxu0 %v498
  %523 = vmatprep.subr.mxu0 0.0
  %524 = vmatpush1.msra.mxu0 %v499
  %525 = vmatprep.subr.mxu0 0.0
  %526 = vmatpush1.msra.mxu0 %v500
  %527 = vmatprep.subr.mxu0 0.0
  %528 = vmatpush1.msra.mxu0 %v501
  %529 = vmatprep.subr.mxu0 0.0
  %530 = vmatpush1.msra.mxu0 %v502
  %531 = vmatprep.subr.mxu0 0.0
  %532 = vmatpush1.msra.mxu0 %v503
  %533 = vmatprep.subr.mxu0 0.0
  %534 = vmatpush1.msra.mxu0 %v504
  %535 = vmatprep.subr.mxu0 0.0
  %536 = vmatpush1.msra.mxu0 %v505
  %537 = vmatprep.subr.mxu0 0.0
  %538 = vmatpush1.msra.mxu0 %v506
  %539 = vmatprep.subr.mxu0 0.0
  %540 = vmatpush1.msra.mxu0 0.0
  %541 = vmatprep.subr.mxu0 0.0
  %542 = vmatpush1.msra.mxu0 0.0
  %543 = vmatprep.subr.mxu0 0.0
  %544 = vmatpush1.msra.mxu0 0.0
  %545 = vmatprep.subr.mxu0 0.0
  %546 = vmatpush1.msra.mxu0 0.0
  %547 = vmatprep.subr.mxu0 0.0
  %548 = vmatpush1.msra.mxu0 0.0
  %549 = vmatprep.subr.mxu0 0.0
  %550 = vmatpush1.msra.mxu0 0.0
  %551 = vmatprep.subr.mxu0 0.0
  %552 = vmatpush1.msra.mxu0 0.0
  %553 = vmatprep.subr.mxu0 0.0
  %554 = vmatpush1.msra.mxu0 0.0
  %555 = vmatprep.subr.mxu0 0.0
  %556 = vmatpush1.msra.mxu0 0.0
  %557 = vmatprep.subr.mxu0 0.0
  %558 = vmatpush1.msra.mxu0 0.0
  %559 = vmatprep.subr.mxu0 0.0
  %560 = vmatpush1.msra.mxu0 0.0
  %561 = vmatprep.subr.mxu0 0.0
  %562 = vmatpush1.msra.mxu0 0.0
  %563 = vmatprep.subr.mxu0 0.0
  %564 = vmatpush1.msra.mxu0 0.0
  %565 = vmatprep.subr.mxu0 0.0
  %566 = vmatpush1.msra.mxu0 0.0
  %567 = vmatprep.subr.mxu0 0.0
  %568 = vmatpush1.msra.mxu0 0.0
  %569 = vmatprep.subr.mxu0 0.0
  %570 = vmatpush1.msra.mxu0 0.0
  %571 = vmatprep.mubr.f32.mxu0 0.0
  %572 = vmatmul.mubr.f32.gmra.mrb[0].mxu0 %v489
  %v573 = vpop.f32.mrb[0].mxu0
  %v574 = vadd.f32 0.0, %v573
  %v575 = vpop.f32.mrb[0].mxu0
  %576 = vdwg.mxu0
  %v577 = vadd.f32 %v490, %v574
  %s578 = scalar_lea.vmem %s0, 40
  %v579 = vld [vmem:[%s578] sm:$0xff]
  %v580 = vadd.f32 %v577, %v579
  %s581 = scalar_lea.vmem %s3, 40
  %582 = vst [vmem:[%s581] sm:$0xff] %v580
  %v583 = vmax.f32 %v580, 0.0
  %v584 = vmul.f32 %v580, 0.8
  %v585 = vld [vmem:[%s1] sm:$0xff]
  %v586 = vld [vmem:[%s1 + $0x8] sm:$0xff]
  %v587 = vld [vmem:[%s1 + $0x10] sm:$0xff]
  %v588 = vld [vmem:[%s1 + $0x18] sm:$0xff]
  %v589 = vld [vmem:[%s1 + $0x20] sm:$0xff]
  %v590 = vld [vmem:[%s1 + $0x28] sm:$0xff]
  %v591 = vld [vmem:[%s1 + $0x30] sm:$0xff]
  %v592 = vld [vmem:[%s1 + $0x38] sm:$0xff]
  %v593 = vld [vmem:[%s1 + $0x40] sm:$0xff]
  %v594 = vld [vmem:[%s1 + $0x48] sm:$0xff]
  %v595 = vld [vmem:[%s1 + $0x50] sm:$0xff]
  %v596 = vld [vmem:[%s1 + $0x58] sm:$0xff]
  %v597 = vld [vmem:[%s1 + $0x60] sm:$0xff]
  %v598 = vld [vmem:[%s1 + $0x68] sm:$0xff]
  %v599 = vld [vmem:[%s1 + $0x70] sm:$0xff]
  %v600 = vld [vmem:[%s1 + $0x78] sm:$0xff]
  %601 = vmatprep.subr.mxu0 0.0
  %602 = vmatpush1.msra.mxu0 %v585
  %603 = vmatprep.subr.mxu0 0.0
  %604 = vmatpush1.msra.mxu0 %v586
  %605 = vmatprep.subr.mxu0 0.0
  %606 = vmatpush1.msra.mxu0 %v587
  %607 = vmatprep.subr.mxu0 0.0
  %608 = vmatpush1.msra.mxu0 %v588
  %609 = vmatprep.subr.mxu0 0.0
  %610 = vmatpush1.msra.mxu0 %v589
  %611 = vmatprep.subr.mxu0 0.0
  %612 = vmatpush1.msra.mxu0 %v590
  %613 = vmatprep.subr.mxu0 0.0
  %614 = vmatpush1.msra.mxu0 %v591
  %615 = vmatprep.subr.mxu0 0.0
  %616 = vmatpush1.msra.mxu0 %v592
  %617 = vmatprep.subr.mxu0 0.0
  %618 = vmatpush1.msra.mxu0 %v593
  %619 = vmatprep.subr.mxu0 0.0
  %620 = vmatpush1.msra.mxu0 %v594
  %621 = vmatprep.subr.mxu0 0.0
  %622 = vmatpush1.msra.mxu0 %v595
  %623 = vmatprep.subr.mxu0 0.0
  %624 = vmatpush1.msra.mxu0 %v596
  %625 = vmatprep.subr.mxu0 0.0
  %626 = vmatpush1.msra.mxu0 %v597
  %627 = vmatprep.subr.mxu0 0.0
  %628 = vmatpush1.msra.mxu0 %v598
  %629 = vmatprep.subr.mxu0 0.0
  %630 = vmatpush1.msra.mxu0 %v599
  %631 = vmatprep.subr.mxu0 0.0
  %632 = vmatpush1.msra.mxu0 %v600
  %633 = vmatprep.subr.mxu0 0.0
  %634 = vmatpush1.msra.mxu0 0.0
  %635 = vmatprep.subr.mxu0 0.0
  %636 = vmatpush1.msra.mxu0 0.0
  %637 = vmatprep.subr.mxu0 0.0
  %638 = vmatpush1.msra.mxu0 0.0
  %639 = vmatprep.subr.mxu0 0.0
  %640 = vmatpush1.msra.mxu0 0.0
  %641 = vmatprep.subr.mxu0 0.0
  %642 = vmatpush1.msra.mxu0 0.0
  %643 = vmatprep.subr.mxu0 0.0
  %644 = vmatpush1.msra.mxu0 0.0
  %645 = vmatprep.subr.mxu0 0.0
  %646 = vmatpush1.msra.mxu0 0.0
  %647 = vmatprep.subr.mxu0 0.0
  %648 = vmatpush1.msra.mxu0 0.0
  %649 = vmatprep.subr.mxu0 0.0
  %650 = vmatpush1.msra.mxu0 0.0
  %651 = vmatprep.subr.mxu0 0.0
  %652 = vmatpush1.msra.mxu0 0.0
  %653 = vmatprep.subr.mxu0 0.0
  %654 = vmatpush1.msra.mxu0 0.0
  %655 = vmatprep.subr.mxu0 0.0
  %656 = vmatpush1.msra.mxu0 0.0
  %657 = vmatprep.subr.mxu0 0.0
  %658 = vmatpush1.msra.mxu0 0.0
  %659 = vmatprep.subr.mxu0 0.0
  %660 = vmatpush1.msra.mxu0 0.0
  %661 = vmatprep.subr.mxu0 0.0
  %662 = vmatpush1.msra.mxu0 0.0
  %663 = vmatprep.subr.mxu0 0.0
  %664 = vmatpush1.msra.mxu0 0.0
  %665 = vmatprep.mubr.f32.mxu0 0.0
  %666 = vmatmul.mubr.f32.gmra.mrb[0].mxu0 %v583
  %v667 = vpop.f32.mrb[0].mxu0
  %v668 = vadd.f32 0.0, %v667
  %v669 = vpop.f32.mrb[0].mxu0
  %670 = vdwg.mxu0
  %v671 = vadd.f32 %v584, %v668
  %s672 = scalar_lea.vmem %s0, 48
  %v673 = vld [vmem:[%s672] sm:$0xff]
  %v674 = vadd.f32 %v671, %v673
  %s675 = scalar_lea.vmem %s3, 48
  %676 = vst [vmem:[%s675] sm:$0xff] %v674
  %v677 = vmax.f32 %v674, 0.0
  %v678 = vmul.f32 %v674, 0.8
  %v679 = vld [vmem:[%s1] sm:$0xff]
  %v680 = vld [vmem:[%s1 + $0x8] sm:$0xff]
  %v681 = vld [vmem:[%s1 + $0x10] sm:$0xff]
  %v682 = vld [vmem:[%s1 + $0x18] sm:$0xff]
  %v683 = vld [vmem:[%s1 + $0x20] sm:$0xff]
  %v684 = vld [vmem:[%s1 + $0x28] sm:$0xff]
  %v685 = vld [vmem:[%s1 + $0x30] sm:$0xff]
  %v686 = vld [vmem:[%s1 + $0x38] sm:$0xff]
  %v687 = vld [vmem:[%s1 + $0x40] sm:$0xff]
  %v688 = vld [vmem:[%s1 + $0x48] sm:$0xff]
  %v689 = vld [vmem:[%s1 + $0x50] sm:$0xff]
  %v690 = vld [vmem:[%s1 + $0x58] sm:$0xff]
  %v691 = vld [vmem:[%s1 + $0x60] sm:$0xff]
  %v692 = vld [vmem:[%s1 + $0x68] sm:$0xff]
  %v693 = vld [vmem:[%s1 + $0x70] sm:$0xff]
  %v694 = vld [vmem:[%s1 + $0x78] sm:$0xff]
  %695 = vmatprep.subr.mxu0 0.0
  %696 = vmatpush1.msra.mxu0 %v679
  %697 = vmatprep.subr.mxu0 0.0
  %698 = vmatpush1.msra.mxu0 %v680
  %699 = vmatprep.subr.mxu0 0.0
  %700 = vmatpush1.msra.mxu0 %v681
  %701 = vmatprep.subr.mxu0 0.0
  %702 = vmatpush1.msra.mxu0 %v682
  %703 = vmatprep.subr.mxu0 0.0
  %704 = vmatpush1.msra.mxu0 %v683
  %705 = vmatprep.subr.mxu0 0.0
  %706 = vmatpush1.msra.mxu0 %v684
  %707 = vmatprep.subr.mxu0 0.0
  %708 = vmatpush1.msra.mxu0 %v685
  %709 = vmatprep.subr.mxu0 0.0
  %710 = vmatpush1.msra.mxu0 %v686
  %711 = vmatprep.subr.mxu0 0.0
  %712 = vmatpush1.msra.mxu0 %v687
  %713 = vmatprep.subr.mxu0 0.0
  %714 = vmatpush1.msra.mxu0 %v688
  %715 = vmatprep.subr.mxu0 0.0
  %716 = vmatpush1.msra.mxu0 %v689
  %717 = vmatprep.subr.mxu0 0.0
  %718 = vmatpush1.msra.mxu0 %v690
  %719 = vmatprep.subr.mxu0 0.0
  %720 = vmatpush1.msra.mxu0 %v691
  %721 = vmatprep.subr.mxu0 0.0
  %722 = vmatpush1.msra.mxu0 %v692
  %723 = vmatprep.subr.mxu0 0.0
  %724 = vmatpush1.msra.mxu0 %v693
  %725 = vmatprep.subr.mxu0 0.0
  %726 = vmatpush1.msra.mxu0 %v694
  %727 = vmatprep.subr.mxu0 0.0
  %728 = vmatpush1.msra.mxu0 0.0
  %729 = vmatprep.subr.mxu0 0.0
  %730 = vmatpush1.msra.mxu0 0.0
  %731 = vmatprep.subr.mxu0 0.0
  %732 = vmatpush1.msra.mxu0 0.0
  %733 = vmatprep.subr.mxu0 0.0
  %734 = vmatpush1.msra.mxu0 0.0
  %735 = vmatprep.subr.mxu0 0.0
  %736 = vmatpush1.msra.mxu0 0.0
  %737 = vmatprep.subr.mxu0 0.0
  %738 = vmatpush1.msra.mxu0 0.0
  %739 = vmatprep.subr.mxu0 0.0
  %740 = vmatpush1.msra.mxu0 0.0
  %741 = vmatprep.subr.mxu0 0.0
  %742 = vmatpush1.msra.mxu0 0.0
  %743 = vmatprep.subr.mxu0 0.0
  %744 = vmatpush1.msra.mxu0 0.0
  %745 = vmatprep.subr.mxu0 0.0
  %746 = vmatpush1.msra.mxu0 0.0
  %747 = vmatprep.subr.mxu0 0.0
  %748 = vmatpush1.msra.mxu0 0.0
  %749 = vmatprep.subr.mxu0 0.0
  %750 = vmatpush1.msra.mxu0 0.0
  %751 = vmatprep.subr.mxu0 0.0
  %752 = vmatpush1.msra.mxu0 0.0
  %753 = vmatprep.subr.mxu0 0.0
  %754 = vmatpush1.msra.mxu0 0.0
  %755 = vmatprep.subr.mxu0 0.0
  %756 = vmatpush1.msra.mxu0 0.0
  %757 = vmatprep.subr.mxu0 0.0
  %758 = vmatpush1.msra.mxu0 0.0
  %759 = vmatprep.mubr.f32.mxu0 0.0
  %760 = vmatmul.mubr.f32.gmra.mrb[0].mxu0 %v677
  %v761 = vpop.f32.mrb[0].mxu0
  %v762 = vadd.f32 0.0, %v761
  %v763 = vpop.f32.mrb[0].mxu0
  %764 = vdwg.mxu0
  %v765 = vadd.f32 %v678, %v762
  %s766 = scalar_lea.vmem %s0, 56
  %v767 = vld [vmem:[%s766] sm:$0xff]
  %v768 = vadd.f32 %v765, %v767
  %s769 = scalar_lea.vmem %s3, 56
  %770 = vst [vmem:[%s769] sm:$0xff] %v768
  %771 = vst [vmem:[#allocation2] sm:$0xff] %v768
  // Predicated region
  $region18: #{rnn_forward.1} parent=0 // pred_check
    _
  $region19: #{rnn_forward.1} parent=0 // pred_check_branch
    %773 = sbr.rel (0) target = $region21
  $region20: #{rnn_forward.1} parent=0 // pred_region
    _
  $region21: #{rnn_forward.1} parent=0 // pred_fallthru
    _
  // Predicated region
  $region22: #{rnn_forward.1} parent=0 // pred_check
    _
  $region23: #{rnn_forward.1} parent=0 // pred_check_branch
    %775 = sbr.rel (0) target = $region25
  $region24: #{rnn_forward.1} parent=0 // pred_region
    _
  $region25: #{rnn_forward.1} parent=0 // pred_fallthru
    _

</llo_original>
